<compile_context>
chip_gen: v7x
topology: tpu7x:2x2x1
jax: 0.10.0
libtpu: 0.0.40
codegen_flags: <defaults>
</compile_context>

<pallas_src>
import functools

import jax
import jax.numpy as jnp
from jax.experimental import pallas as pl
from jax.experimental.pallas import tpu as pltpu


def _round_up(x, m):
    return ((x + m - 1) // m) * m


def _cdiv(a, b):
    return (a + b - 1) // b


def _vmem_capacity_bytes():
    """Physical VMEM per TensorCore; conservative (v7x = 64 MiB) fallback."""
    try:
        info = pltpu.get_tpu_info()
        cap = getattr(info, "vmem_capacity_bytes", None)
        if cap:
            return int(cap)
    except Exception:
        pass
    return 64 * 1024 * 1024


# ---------------------------------------------------------------------------
# Kernels
# ---------------------------------------------------------------------------
def _ffn_resident_kernel(x_ref, w1_ref, b1_ref, w2_ref, b2_ref, o_ref):
    """Full FFN for one row tile; W1/W2/b1/b2 resident in VMEM."""
    h = jnp.dot(x_ref[...], w1_ref[...], preferred_element_type=jnp.float32)
    h = jnp.maximum(h + b1_ref[...].astype(jnp.float32), 0.0)
    o = jnp.dot(h.astype(w2_ref.dtype), w2_ref[...],
                preferred_element_type=jnp.float32)
    o_ref[...] = (o + b2_ref[...].astype(jnp.float32)).astype(o_ref.dtype)


def _ffn_streamed_kernel(x_ref, w1_ref, b1_ref, w2_ref, b2_ref, o_ref, acc_ref):
    """One (row-tile, ff-tile) step; W1/W2 streamed, f32 accumulation."""
    k = pl.program_id(1)
    tk = w1_ref.shape[1]  # static ff tile size

    @pl.when(k == 0)
    def _init():
        # Fold the output bias into the accumulator init: saves one full
        # (tm, dm_p) VPU pass and the zero-fill on every row tile.
        acc_ref[...] = jnp.broadcast_to(
            b2_ref[...].astype(jnp.float32), acc_ref.shape)

    # b1 is resident as a single (1, ff_p) block; slice this step's chunk.
    b1_k = b1_ref[:, pl.ds(pl.multiple_of(k * tk, 128), tk)]

    h = jnp.dot(x_ref[...], w1_ref[...], preferred_element_type=jnp.float32)
    h = jnp.maximum(h + b1_k.astype(jnp.float32), 0.0)
    acc_ref[...] += jnp.dot(h.astype(w2_ref.dtype), w2_ref[...],
                            preferred_element_type=jnp.float32)

    @pl.when(k == pl.num_programs(1) - 1)
    def _finalize():
        o_ref[...] = acc_ref[...].astype(o_ref.dtype)


# ---------------------------------------------------------------------------
# Forward implementation (padded weights are call-time arguments; all tiling
# configuration is static).
# ---------------------------------------------------------------------------
@functools.partial(jax.jit, static_argnames=(
    "d_model", "ff_dim", "block_rows", "tk", "resident", "vmem_cap"))
def _ffn_impl(x, w1p, b1p, w2p, b2p, *, d_model, ff_dim, block_rows, tk,
              resident, vmem_cap):
    batch, seq, _ = x.shape
    rows = batch * seq
    dm_p, ff_p = w1p.shape
    dtype = x.dtype
    itemsize = jnp.dtype(dtype).itemsize

    # Row tiling: balanced tiles, 16-aligned (bf16 sublane packing), minimal
    # padding waste, grid[0] >= 2 whenever rows span multiple tiles (megacore).
    row_align = 16
    rows_a = _round_up(rows, row_align)
    n_row = _cdiv(rows_a, block_rows)
    tm = _round_up(_cdiv(rows_a, n_row), row_align)
    rows_p = tm * n_row

    # Only the activations are padded per call; weights were padded once.
    x2d = x.reshape(rows, -1)
    if (rows_p, dm_p) != (rows, x2d.shape[1]):
        x2d = jnp.pad(x2d, ((0, rows_p - rows), (0, dm_p - x2d.shape[1])))

    cost = pl.CostEstimate(
        flops=4 * rows * d_model * ff_dim,
        transcendentals=0,
        bytes_accessed=(2 * rows * d_model
                        + 2 * d_model * ff_dim + ff_dim + d_model) * itemsize,
    )

    # VMEM requirement (double buffers counted conservatively) + headroom,
    # capped at 75% of physical VMEM for this generation.
    x_tile = tm * dm_p * itemsize
    o_tile = tm * dm_p * itemsize
    if resident:
        need = (2 * (x_tile + o_tile)
                + 2 * (dm_p * ff_p + ff_p * dm_p + ff_p + dm_p) * itemsize)
    else:
        need = (2 * (x_tile + o_tile)
                + 2 * (dm_p * tk + tk * dm_p + ff_p + dm_p) * itemsize
                + tm * dm_p * 4)  # f32 accumulator scratch
    vmem_limit = int(min((vmem_cap * 3) // 4,
                         max(32 * 1024 * 1024, need + 4 * 1024 * 1024)))

    if resident:
        grid = (n_row,)
        in_specs = [
            pl.BlockSpec((tm, dm_p), lambda i: (i, 0)),     # x row tile
            pl.BlockSpec((dm_p, ff_p), lambda i: (0, 0)),   # W1 resident
            pl.BlockSpec((1, ff_p), lambda i: (0, 0)),      # b1 resident
            pl.BlockSpec((ff_p, dm_p), lambda i: (0, 0)),   # W2 resident
            pl.BlockSpec((1, dm_p), lambda i: (0, 0)),      # b2 resident
        ]
        out_specs = pl.BlockSpec((tm, dm_p), lambda i: (i, 0))
        scratch_shapes = []
        kernel = _ffn_resident_kernel
        dims = ("parallel",)
    else:
        n_ff = ff_p // tk
        grid = (n_row, n_ff)
        in_specs = [
            pl.BlockSpec((tm, dm_p), lambda i, k: (i, 0)),   # x row tile
            pl.BlockSpec((dm_p, tk), lambda i, k: (0, k)),   # W1 ff-col tile
            pl.BlockSpec((1, ff_p), lambda i, k: (0, 0)),    # b1 resident
            pl.BlockSpec((tk, dm_p), lambda i, k: (k, 0)),   # W2 ff-row tile
            pl.BlockSpec((1, dm_p), lambda i, k: (0, 0)),    # b2 resident
        ]
        out_specs = pl.BlockSpec((tm, dm_p), lambda i, k: (i, 0))
        scratch_shapes = [pltpu.VMEM((tm, dm_p), jnp.float32)]
        kernel = _ffn_streamed_kernel
        dims = ("parallel", "arbitrary")

    out2d = pl.pallas_call(
        kernel,
        out_shape=jax.ShapeDtypeStruct((rows_p, dm_p), dtype),
        grid=grid,
        in_specs=in_specs,
        out_specs=out_specs,
        scratch_shapes=scratch_shapes,
        compiler_params=pltpu.CompilerParams(
            dimension_semantics=dims,
            vmem_limit_bytes=vmem_limit,
        ),
        cost_estimate=cost,
    )(x2d, w1p, b1p, w2p, b2p)

    return out2d[:rows, :d_model].reshape(batch, seq, d_model)


# ---------------------------------------------------------------------------
# Public constructor: pad weights ONCE, pick resident vs streamed, return fwd.
# ---------------------------------------------------------------------------
def make_ffn(w1, b1, w2, b2, *, block_rows=512, block_ff=1024,
             allow_resident=True):
    """w1:(d_model,ff_dim), b1:(ff_dim,), w2:(ff_dim,d_model), b2:(d_model,).

    (PyTorch nn.Linear stores W as (out,in); pass the transposed weights.)
    Returns forward(x) with x:(batch, seq, d_model).
    """
    d_model, ff_dim = w1.shape
    itemsize = jnp.dtype(w1.dtype).itemsize
    vmem_cap = _vmem_capacity_bytes()

    # Lane alignment: 128 is the hard requirement; default tile sizes
    # (512 / 1024) are already multiples of 256 for the v6e/v7x MXU.
    dm_p = _round_up(d_model, 128)
    ff_a = _round_up(ff_dim, 128)

    # Resident weights if (conservatively double-buffered) W1+W2 leave
    # comfortable headroom: <= ~20 MiB raw on v7x (64 MiB VMEM),
    # <= ~44 MiB on v5e/v6e (128 MiB VMEM).
    w_bytes = 2 * dm_p * ff_a * itemsize
    resident = bool(allow_resident
                    and 2 * w_bytes + (8 << 20) <= (vmem_cap * 3) // 4)

    if resident:
        tk = ff_a
        ff_p = ff_a
    else:
        # Balanced ff tiles that divide the aligned ff dim (minimal padding).
        n_ff = max(1, _cdiv(ff_a, block_ff))
        tk = _round_up(_cdiv(ff_a, n_ff), 128)
        ff_p = tk * n_ff

    # Pad weights/biases once (not per forward call).
    w1p = jnp.pad(w1, ((0, dm_p - d_model), (0, ff_p - ff_dim)))
    w2p = jnp.pad(w2, ((0, ff_p - ff_dim), (0, dm_p - d_model)))
    b1p = jnp.pad(b1, (0, ff_p - ff_dim)).reshape(1, ff_p)
    b2p = jnp.pad(b2, (0, dm_p - d_model)).reshape(1, dm_p)

    def forward(x):
        return _ffn_impl(x, w1p, b1p, w2p, b2p,
                         d_model=d_model, ff_dim=ff_dim,
                         block_rows=block_rows, tk=tk,
                         resident=resident, vmem_cap=vmem_cap)

    return forward


if __name__ == "__main__":
    # Small shapes consistent with the module's forward.
    batch, seq, d_model, ff_dim = 2, 8, 32, 64

    key = jax.random.PRNGKey(0)
    kx, k1, k2, k3, k4 = jax.random.split(key, 5)

    x = jax.random.normal(kx, (batch, seq, d_model), dtype=jnp.float32)
    w1 = jax.random.normal(k1, (d_model, ff_dim), dtype=jnp.float32) * 0.1
    b1 = jax.random.normal(k2, (ff_dim,), dtype=jnp.float32) * 0.1
    w2 = jax.random.normal(k3, (ff_dim, d_model), dtype=jnp.float32) * 0.1
    b2 = jax.random.normal(k4, (d_model,), dtype=jnp.float32) * 0.1

    ref = jnp.maximum(x @ w1 + b1, 0.0) @ w2 + b2

    # 1) f32, resident-weights path: tight correctness check.
    ffn = make_ffn(w1, b1, w2, b2)
    out = jax.block_until_ready(ffn(x))
    assert out.shape == (batch, seq, d_model)
    assert jnp.allclose(out, ref, atol=1e-4, rtol=1e-4)

    # 2) bf16 (production dtype), resident path, f32 accumulation in-kernel.
    xb, w1b, b1b, w2b, b2b = (a.astype(jnp.bfloat16) for a in (x, w1, b1, w2, b2))
    ffn_bf = make_ffn(w1b, b1b, w2b, b2b)
    out_bf = jax.block_until_ready(ffn_bf(xb))
    ref_bf = (jnp.maximum(xb.astype(jnp.float32) @ w1b.astype(jnp.float32)
                          + b1b.astype(jnp.float32), 0.0)
              @ w2b.astype(jnp.float32) + b2b.astype(jnp.float32))
    assert jnp.allclose(out_bf.astype(jnp.float32), ref_bf, atol=5e-2, rtol=5e-2)

    # 3) Forced streamed-weights path (what very large ff_dim would use):
    #    exercises the 2-D grid (row-parallel x ff-reduction) + f32 accumulator.
    b2_, s2_, dm2, ff2 = 4, 64, 128, 512
    kk = jax.random.split(jax.random.PRNGKey(1), 5)
    x2 = jax.random.normal(kk[0], (b2_, s2_, dm2), dtype=jnp.bfloat16)
    w1_2 = (jax.random.normal(kk[1], (dm2, ff2), dtype=jnp.float32) * 0.05
            ).astype(jnp.bfloat16)
    b1_2 = (jax.random.normal(kk[2], (ff2,), dtype=jnp.float32) * 0.05
            ).astype(jnp.bfloat16)
    w2_2 = (jax.random.normal(kk[3], (ff2, dm2), dtype=jnp.float32) * 0.05
            ).astype(jnp.bfloat16)
    b2_2 = (jax.random.normal(kk[4], (dm2,), dtype=jnp.float32) * 0.05
            ).astype(jnp.bfloat16)
    ref2 = (jnp.maximum(x2.astype(jnp.float32) @ w1_2.astype(jnp.float32)
                        + b1_2.astype(jnp.float32), 0.0)
            @ w2_2.astype(jnp.float32) + b2_2.astype(jnp.float32))

    ffn_stream = make_ffn(w1_2, b1_2, w2_2, b2_2,
                          block_rows=128, block_ff=256, allow_resident=False)
    out2 = jax.block_until_ready(ffn_stream(x2))
    assert out2.shape == (b2_, s2_, dm2)
    assert jnp.allclose(out2.astype(jnp.float32), ref2, atol=5e-2, rtol=5e-2)

    print("KERNEL_OK")
</pallas_src>

<mosaic_0001>
module attributes {stable_mosaic.version = 11 : i64} {
  func.func @_ffn_resident_kernel(%arg0: i32, %arg1: memref<16x128xf32, #tpu.memory_space<vmem>>, %arg2: memref<128x128xf32, #tpu.memory_space<vmem>>, %arg3: memref<1x128xf32, #tpu.memory_space<vmem>>, %arg4: memref<128x128xf32, #tpu.memory_space<vmem>>, %arg5: memref<1x128xf32, #tpu.memory_space<vmem>>, %arg6: memref<16x128xf32, #tpu.memory_space<vmem>>) attributes {dimension_semantics = [#tpu.dimension_semantics<parallel>], iteration_bounds = array<i64: 1>, scalar_prefetch = 0 : i64, scratch_operands = 0 : i64, tpu.core_type = #tpu.core_type<tc>, window_params = [{transform_indices = @transform_0, window_bounds = array<i64: 16, 128>}, {pipeline_mode = #tpu.pipeline_mode<synchronous>, transform_indices = @transform_1, window_bounds = array<i64: 128, 128>}, {pipeline_mode = #tpu.pipeline_mode<synchronous>, transform_indices = @transform_2, window_bounds = array<i64: 1, 128>}, {pipeline_mode = #tpu.pipeline_mode<synchronous>, transform_indices = @transform_3, window_bounds = array<i64: 128, 128>}, {pipeline_mode = #tpu.pipeline_mode<synchronous>, transform_indices = @transform_4, window_bounds = array<i64: 1, 128>}, {transform_indices = @transform_5, window_bounds = array<i64: 16, 128>}]} {
    %c0 = arith.constant 0 : index
    %c0_0 = arith.constant 0 : index
    %0 = vector.load %arg1[%c0, %c0_0] : memref<16x128xf32, #tpu.memory_space<vmem>>, vector<16x128xf32>
    %c0_1 = arith.constant 0 : index
    %c0_2 = arith.constant 0 : index
    %1 = vector.load %arg2[%c0_1, %c0_2] : memref<128x128xf32, #tpu.memory_space<vmem>>, vector<128x128xf32>
    %cst = arith.constant dense<0.000000e+00> : vector<16x128xf32>
    %2 = tpu.matmul %0, %1, %cst {dimension_numbers = #tpu.dot_dimension_numbers<[1], [0], [0], [1], [0, 0, 1, 1], [], []>} : vector<16x128xf32>, vector<128x128xf32>, vector<16x128xf32> -> vector<16x128xf32>
    %c0_3 = arith.constant 0 : index
    %c0_4 = arith.constant 0 : index
    %3 = vector.load %arg3[%c0_3, %c0_4] : memref<1x128xf32, #tpu.memory_space<vmem>>, vector<1x128xf32>
    %4 = vector.broadcast %3 : vector<1x128xf32> to vector<16x128xf32>
    %5 = arith.addf %2, %4 : vector<16x128xf32>
    %cst_5 = arith.constant 0.000000e+00 : f32
    %6 = vector.broadcast %cst_5 : f32 to vector<16x128xf32>
    %7 = arith.maximumf %5, %6 : vector<16x128xf32>
    %c0_6 = arith.constant 0 : index
    %c0_7 = arith.constant 0 : index
    %8 = vector.load %arg4[%c0_6, %c0_7] : memref<128x128xf32, #tpu.memory_space<vmem>>, vector<128x128xf32>
    %cst_8 = arith.constant dense<0.000000e+00> : vector<16x128xf32>
    %9 = tpu.matmul %7, %8, %cst_8 {dimension_numbers = #tpu.dot_dimension_numbers<[1], [0], [0], [1], [0, 0, 1, 1], [], []>} : vector<16x128xf32>, vector<128x128xf32>, vector<16x128xf32> -> vector<16x128xf32>
    %c0_9 = arith.constant 0 : index
    %c0_10 = arith.constant 0 : index
    %10 = vector.load %arg5[%c0_9, %c0_10] : memref<1x128xf32, #tpu.memory_space<vmem>>, vector<1x128xf32>
    %11 = vector.broadcast %10 : vector<1x128xf32> to vector<16x128xf32>
    %12 = arith.addf %9, %11 : vector<16x128xf32>
    %c0_11 = arith.constant 0 : index
    %c0_12 = arith.constant 0 : index
    %13 = vector.load %arg6[%c0_11, %c0_12] : memref<16x128xf32, #tpu.memory_space<vmem>>, vector<16x128xf32>
    tpu.vector_store %arg6[%c0_11, %c0_12], %12 {strides = array<i32>} : memref<16x128xf32, #tpu.memory_space<vmem>>, vector<16x128xf32>,
    return
  }
  func.func @transform_0(%arg0: i32) -> (i32, i32) {
    %c0_i32 = arith.constant 0 : i32
    %c0_i32_0 = arith.constant 0 : i32
    return %arg0, %c0_i32 : i32, i32
  }
  func.func @transform_1(%arg0: i32) -> (i32, i32) {
    %c0_i32 = arith.constant 0 : i32
    %c0_i32_0 = arith.constant 0 : i32
    %c0_i32_1 = arith.constant 0 : i32
    return %c0_i32, %c0_i32_0 : i32, i32
  }
  func.func @transform_2(%arg0: i32) -> (i32, i32) {
    %c0_i32 = arith.constant 0 : i32
    %c0_i32_0 = arith.constant 0 : i32
    %c0_i32_1 = arith.constant 0 : i32
    return %c0_i32, %c0_i32_0 : i32, i32
  }
  func.func @transform_3(%arg0: i32) -> (i32, i32) {
    %c0_i32 = arith.constant 0 : i32
    %c0_i32_0 = arith.constant 0 : i32
    %c0_i32_1 = arith.constant 0 : i32
    return %c0_i32, %c0_i32_0 : i32, i32
  }
  func.func @transform_4(%arg0: i32) -> (i32, i32) {
    %c0_i32 = arith.constant 0 : i32
    %c0_i32_0 = arith.constant 0 : i32
    %c0_i32_1 = arith.constant 0 : i32
    return %c0_i32, %c0_i32_0 : i32, i32
  }
  func.func @transform_5(%arg0: i32) -> (i32, i32) {
    %c0_i32 = arith.constant 0 : i32
    %c0_i32_0 = arith.constant 0 : i32
    return %arg0, %c0_i32 : i32, i32
  }
}

</mosaic_0001>

<llo_original>
// kernel: _ffn_impl.1
$region0: #{_ffn_impl.1}
  #allocation0 [shape = 'u32[]', space=smem, size = 0x4, offset = 0x4, fixed_abs, tag = 'smem constant byte address 0x4 - core index']
  #allocation1 [shape = 'u32[144,128]{1,0:T(1,128)}', space=vmem, size = 0x12000, scoped, tag = 'internal scratch']
  %s0 = inlined_call_operand.vmem [shape: f32[16,128], index: 0, kind: input, shape index: {}]
  %s1 = inlined_call_operand.hbm [shape: f32[128,128], index: 1, kind: input, shape index: {}]
  %s2 = inlined_call_operand.vmem [shape: f32[1,128], index: 2, kind: input, shape index: {}]
  %s3 = inlined_call_operand.hbm [shape: f32[128,128], index: 3, kind: input, shape index: {}]
  %s4 = inlined_call_operand.vmem [shape: f32[1,128], index: 4, kind: input, shape index: {}]
  %s5 = inlined_call_operand.vmem [shape: f32[16,128], index: 5, kind: output, shape index: {}]
  %s6 = sld [smem:[#allocation0]]
  $region38: #{_ffn_impl.1} parent=0
    _
  %s8 = ssub.s32 1, %s6
  %s9 = scalar_select 0, %s8, %s6
  $region1: #{_ffn_impl.1} parent=0
    #allocation2 [shape = 'u8[65536]{0}', space=vmem, size = 0x10000, scoped, tag = 'input window, operand 1, single buffered']
    #allocation3 [shape = 's32[1]{0}', space=sflag, size = 0x4, scoped, tag = 'scoped memory for _ffn_impl.1']
    #allocation4 [shape = 'u8[65536]{0}', space=vmem, size = 0x10000, scoped, tag = 'input window, operand 3, single buffered']
    #allocation5 [shape = 's32[1]{0}', space=sflag, size = 0x4, scoped, tag = 'scoped memory for _ffn_impl.1']
    %10 = vsyncpa [#allocation3], 0
    %11 = vsyncpa [#allocation5], 0
    // Predicated region
    $region2: #{_ffn_impl.1} parent=1 // pred_check
      _
    $region3: #{_ffn_impl.1} parent=1 // pred_check_branch
      %13 = sbr.rel (0) target = $region5
    $region4: #{_ffn_impl.1} parent=1 // pred_region
      _
    $region5: #{_ffn_impl.1} parent=1 // pred_fallthru
      _
    // Predicated region
    $region6: #{_ffn_impl.1} parent=1 // pred_check
      _
    $region7: #{_ffn_impl.1} parent=1 // pred_check_branch
      %15 = sbr.rel (0) target = $region9
    $region8: #{_ffn_impl.1} parent=1 // pred_region
      %s17 = ssub.s32 2048, 2048
      %18 = vsyncadd [#allocation3], %s17
      %s19 = sshll.u32 [#allocation2], 4
      %s20 = int_to_ptr.vmem [resolvable:$true] %s19
      %25 = dma.hbm_to_vmem [thread:$0]  %s1, 2048, %s20, [#allocation3], 128, 128, 8
    $region9: #{_ffn_impl.1} parent=1 // pred_fallthru
      _
    // Predicated region
    $region10: #{_ffn_impl.1} parent=1 // pred_check
      _
    $region11: #{_ffn_impl.1} parent=1 // pred_check_branch
      %27 = sbr.rel (0) target = $region13
    $region12: #{_ffn_impl.1} parent=1 // pred_region
      _
    $region13: #{_ffn_impl.1} parent=1 // pred_fallthru
      _
    // Predicated region
    $region14: #{_ffn_impl.1} parent=1 // pred_check
      _
    $region15: #{_ffn_impl.1} parent=1 // pred_check_branch
      %29 = sbr.rel (0) target = $region17
    $region16: #{_ffn_impl.1} parent=1 // pred_region
      %s31 = ssub.s32 2048, 2048
      %32 = vsyncadd [#allocation5], %s31
      %s33 = sshll.u32 [#allocation4], 4
      %s34 = int_to_ptr.vmem [resolvable:$true] %s33
      %39 = dma.hbm_to_vmem [thread:$0]  %s3, 2048, %s34, [#allocation5], 128, 128, 8
    $region17: #{_ffn_impl.1} parent=1 // pred_fallthru
      _
    // Predicated region
    $region18: #{_ffn_impl.1} parent=1 // pred_check
      _
    $region19: #{_ffn_impl.1} parent=1 // pred_check_branch
      %41 = sbr.rel (0) target = $region21
    $region20: #{_ffn_impl.1} parent=1 // pred_region
      _
    $region21: #{_ffn_impl.1} parent=1 // pred_fallthru
      _
    // Predicated region
    $region22: #{_ffn_impl.1} parent=1 // pred_check
      _
    $region23: #{_ffn_impl.1} parent=1 // pred_check_branch
      %43 = sbr.rel (0) target = $region25
    $region24: #{_ffn_impl.1} parent=1 // pred_region
      %44 = dma.done [#allocation3], 2048
    $region25: #{_ffn_impl.1} parent=1 // pred_fallthru
      _
    // Predicated region
    $region26: #{_ffn_impl.1} parent=1 // pred_check
      _
    $region27: #{_ffn_impl.1} parent=1 // pred_check_branch
      %46 = sbr.rel (0) target = $region29
    $region28: #{_ffn_impl.1} parent=1 // pred_region
      %47 = dma.done [#allocation5], 2048
    $region29: #{_ffn_impl.1} parent=1 // pred_fallthru
      _
    %v48 = vld [vmem:[%s0] sm:$0xff]
    %v49 = vld [vmem:[%s0 + $0x8] sm:$0xff]
    %v50 = vld [vmem:[#allocation2] sm:$0xff]
    %v51 = vld [vmem:[#allocation2 + $0x8] sm:$0xff]
    %v52 = vld [vmem:[#allocation2 + $0x10] sm:$0xff]
    %v53 = vld [vmem:[#allocation2 + $0x18] sm:$0xff]
    %v54 = vld [vmem:[#allocation2 + $0x20] sm:$0xff]
    %v55 = vld [vmem:[#allocation2 + $0x28] sm:$0xff]
    %v56 = vld [vmem:[#allocation2 + $0x30] sm:$0xff]
    %v57 = vld [vmem:[#allocation2 + $0x38] sm:$0xff]
    %v58 = vld [vmem:[#allocation2 + $0x40] sm:$0xff]
    %v59 = vld [vmem:[#allocation2 + $0x48] sm:$0xff]
    %v60 = vld [vmem:[#allocation2 + $0x50] sm:$0xff]
    %v61 = vld [vmem:[#allocation2 + $0x58] sm:$0xff]
    %v62 = vld [vmem:[#allocation2 + $0x60] sm:$0xff]
    %v63 = vld [vmem:[#allocation2 + $0x68] sm:$0xff]
    %v64 = vld [vmem:[#allocation2 + $0x70] sm:$0xff]
    %v65 = vld [vmem:[#allocation2 + $0x78] sm:$0xff]
    %v66 = vld [vmem:[%s2] sm:$0x1]
    %v68 = vlaneseq
    %v69 = vshrl.u32 %v68, 7
    %v70 = vsub.s32 0, %v69
    %v71 = vrot.slane %v66, %v70
    %73 = vmatprep.subr.mxu0 0.0
    %74 = vmatpush1.msra.mxu0 %v50
    %75 = vmatprep.subr.mxu0 0.0
    %76 = vmatpush1.msra.mxu0 %v51
    %77 = vmatprep.subr.mxu0 0.0
    %78 = vmatpush1.msra.mxu0 %v52
    %79 = vmatprep.subr.mxu0 0.0
    %80 = vmatpush1.msra.mxu0 %v53
    %81 = vmatprep.subr.mxu0 0.0
    %82 = vmatpush1.msra.mxu0 %v54
    %83 = vmatprep.subr.mxu0 0.0
    %84 = vmatpush1.msra.mxu0 %v55
    %85 = vmatprep.subr.mxu0 0.0
    %86 = vmatpush1.msra.mxu0 %v56
    %87 = vmatprep.subr.mxu0 0.0
    %88 = vmatpush1.msra.mxu0 %v57
    %89 = vmatprep.subr.mxu0 0.0
    %90 = vmatpush1.msra.mxu0 %v58
    %91 = vmatprep.subr.mxu0 0.0
    %92 = vmatpush1.msra.mxu0 %v59
    %93 = vmatprep.subr.mxu0 0.0
    %94 = vmatpush1.msra.mxu0 %v60
    %95 = vmatprep.subr.mxu0 0.0
    %96 = vmatpush1.msra.mxu0 %v61
    %97 = vmatprep.subr.mxu0 0.0
    %98 = vmatpush1.msra.mxu0 %v62
    %99 = vmatprep.subr.mxu0 0.0
    %100 = vmatpush1.msra.mxu0 %v63
    %101 = vmatprep.subr.mxu0 0.0
    %102 = vmatpush1.msra.mxu0 %v64
    %103 = vmatprep.subr.mxu0 0.0
    %104 = vmatpush1.msra.mxu0 %v65
    %105 = vmatprep.subr.mxu0 0.0
    %106 = vmatpush1.msra.mxu0 0.0
    %107 = vmatprep.subr.mxu0 0.0
    %108 = vmatpush1.msra.mxu0 0.0
    %109 = vmatprep.subr.mxu0 0.0
    %110 = vmatpush1.msra.mxu0 0.0
    %111 = vmatprep.subr.mxu0 0.0
    %112 = vmatpush1.msra.mxu0 0.0
    %113 = vmatprep.subr.mxu0 0.0
    %114 = vmatpush1.msra.mxu0 0.0
    %115 = vmatprep.subr.mxu0 0.0
    %116 = vmatpush1.msra.mxu0 0.0
    %117 = vmatprep.subr.mxu0 0.0
    %118 = vmatpush1.msra.mxu0 0.0
    %119 = vmatprep.subr.mxu0 0.0
    %120 = vmatpush1.msra.mxu0 0.0
    %121 = vmatprep.subr.mxu0 0.0
    %122 = vmatpush1.msra.mxu0 0.0
    %123 = vmatprep.subr.mxu0 0.0
    %124 = vmatpush1.msra.mxu0 0.0
    %125 = vmatprep.subr.mxu0 0.0
    %126 = vmatpush1.msra.mxu0 0.0
    %127 = vmatprep.subr.mxu0 0.0
    %128 = vmatpush1.msra.mxu0 0.0
    %129 = vmatprep.subr.mxu0 0.0
    %130 = vmatpush1.msra.mxu0 0.0
    %131 = vmatprep.subr.mxu0 0.0
    %132 = vmatpush1.msra.mxu0 0.0
    %133 = vmatprep.subr.mxu0 0.0
    %134 = vmatpush1.msra.mxu0 0.0
    %135 = vmatprep.subr.mxu0 0.0
    %136 = vmatpush1.msra.mxu0 0.0
    %137 = vmatprep.mubr.f32.mxu0 0.0
    %138 = vmatmul.mubr.f32.gmra.mrb[0].mxu0 %v48
    %v139 = vpop.f32.mrb[0].mxu0
    %v140 = vadd.f32 %v71, %v139
    %v141 = vpop.f32.mrb[0].mxu0
    %142 = vmatprep.mubr.f32.mxu0 0.0
    %143 = vmatmul.mubr.f32.gmra.mrb[0].mxu0 %v49
    %v144 = vpop.f32.mrb[0].mxu0
    %v145 = vadd.f32 %v71, %v144
    %v146 = vpop.f32.mrb[0].mxu0
    %147 = vdwg.mxu0
    %v148 = vmax.f32 %v140, 0.0
    %v149 = vmax.f32 %v145, 0.0
    %v150 = vld [vmem:[#allocation4] sm:$0xff]
    %v151 = vld [vmem:[#allocation4 + $0x8] sm:$0xff]
    %v152 = vld [vmem:[#allocation4 + $0x10] sm:$0xff]
    %v153 = vld [vmem:[#allocation4 + $0x18] sm:$0xff]
    %v154 = vld [vmem:[#allocation4 + $0x20] sm:$0xff]
    %v155 = vld [vmem:[#allocation4 + $0x28] sm:$0xff]
    %v156 = vld [vmem:[#allocation4 + $0x30] sm:$0xff]
    %v157 = vld [vmem:[#allocation4 + $0x38] sm:$0xff]
    %v158 = vld [vmem:[#allocation4 + $0x40] sm:$0xff]
    %v159 = vld [vmem:[#allocation4 + $0x48] sm:$0xff]
    %v160 = vld [vmem:[#allocation4 + $0x50] sm:$0xff]
    %v161 = vld [vmem:[#allocation4 + $0x58] sm:$0xff]
    %v162 = vld [vmem:[#allocation4 + $0x60] sm:$0xff]
    %v163 = vld [vmem:[#allocation4 + $0x68] sm:$0xff]
    %v164 = vld [vmem:[#allocation4 + $0x70] sm:$0xff]
    %v165 = vld [vmem:[#allocation4 + $0x78] sm:$0xff]
    %v166 = vld [vmem:[%s4] sm:$0x1]
    %v168 = vlaneseq
    %v169 = vshrl.u32 %v168, 7
    %v170 = vsub.s32 0, %v169
    %v171 = vrot.slane %v166, %v170
    %173 = vmatprep.subr.mxu0 0.0
    %174 = vmatpush1.msra.mxu0 %v150
    %175 = vmatprep.subr.mxu0 0.0
    %176 = vmatpush1.msra.mxu0 %v151
    %177 = vmatprep.subr.mxu0 0.0
    %178 = vmatpush1.msra.mxu0 %v152
    %179 = vmatprep.subr.mxu0 0.0
    %180 = vmatpush1.msra.mxu0 %v153
    %181 = vmatprep.subr.mxu0 0.0
    %182 = vmatpush1.msra.mxu0 %v154
    %183 = vmatprep.subr.mxu0 0.0
    %184 = vmatpush1.msra.mxu0 %v155
    %185 = vmatprep.subr.mxu0 0.0
    %186 = vmatpush1.msra.mxu0 %v156
    %187 = vmatprep.subr.mxu0 0.0
    %188 = vmatpush1.msra.mxu0 %v157
    %189 = vmatprep.subr.mxu0 0.0
    %190 = vmatpush1.msra.mxu0 %v158
    %191 = vmatprep.subr.mxu0 0.0
    %192 = vmatpush1.msra.mxu0 %v159
    %193 = vmatprep.subr.mxu0 0.0
    %194 = vmatpush1.msra.mxu0 %v160
    %195 = vmatprep.subr.mxu0 0.0
    %196 = vmatpush1.msra.mxu0 %v161
    %197 = vmatprep.subr.mxu0 0.0
    %198 = vmatpush1.msra.mxu0 %v162
    %199 = vmatprep.subr.mxu0 0.0
    %200 = vmatpush1.msra.mxu0 %v163
    %201 = vmatprep.subr.mxu0 0.0
    %202 = vmatpush1.msra.mxu0 %v164
    %203 = vmatprep.subr.mxu0 0.0
    %204 = vmatpush1.msra.mxu0 %v165
    %205 = vmatprep.subr.mxu0 0.0
    %206 = vmatpush1.msra.mxu0 0.0
    %207 = vmatprep.subr.mxu0 0.0
    %208 = vmatpush1.msra.mxu0 0.0
    %209 = vmatprep.subr.mxu0 0.0
    %210 = vmatpush1.msra.mxu0 0.0
    %211 = vmatprep.subr.mxu0 0.0
    %212 = vmatpush1.msra.mxu0 0.0
    %213 = vmatprep.subr.mxu0 0.0
    %214 = vmatpush1.msra.mxu0 0.0
    %215 = vmatprep.subr.mxu0 0.0
    %216 = vmatpush1.msra.mxu0 0.0
    %217 = vmatprep.subr.mxu0 0.0
    %218 = vmatpush1.msra.mxu0 0.0
    %219 = vmatprep.subr.mxu0 0.0
    %220 = vmatpush1.msra.mxu0 0.0
    %221 = vmatprep.subr.mxu0 0.0
    %222 = vmatpush1.msra.mxu0 0.0
    %223 = vmatprep.subr.mxu0 0.0
    %224 = vmatpush1.msra.mxu0 0.0
    %225 = vmatprep.subr.mxu0 0.0
    %226 = vmatpush1.msra.mxu0 0.0
    %227 = vmatprep.subr.mxu0 0.0
    %228 = vmatpush1.msra.mxu0 0.0
    %229 = vmatprep.subr.mxu0 0.0
    %230 = vmatpush1.msra.mxu0 0.0
    %231 = vmatprep.subr.mxu0 0.0
    %232 = vmatpush1.msra.mxu0 0.0
    %233 = vmatprep.subr.mxu0 0.0
    %234 = vmatpush1.msra.mxu0 0.0
    %235 = vmatprep.subr.mxu0 0.0
    %236 = vmatpush1.msra.mxu0 0.0
    %237 = vmatprep.mubr.f32.mxu0 0.0
    %238 = vmatmul.mubr.f32.gmra.mrb[0].mxu0 %v148
    %v239 = vpop.f32.mrb[0].mxu0
    %v240 = vadd.f32 %v171, %v239
    %v241 = vpop.f32.mrb[0].mxu0
    %242 = vmatprep.mubr.f32.mxu0 0.0
    %243 = vmatmul.mubr.f32.gmra.mrb[0].mxu0 %v149
    %v244 = vpop.f32.mrb[0].mxu0
    %v245 = vadd.f32 %v171, %v244
    %v246 = vpop.f32.mrb[0].mxu0
    %247 = vdwg.mxu0
    %248 = vst [vmem:[%s5] sm:$0xff] %v240
    %249 = vst [vmem:[%s5 + $0x8] sm:$0xff] %v245
    // Predicated region
    $region30: #{_ffn_impl.1} parent=1 // pred_check
      _
    $region31: #{_ffn_impl.1} parent=1 // pred_check_branch
      %251 = sbr.rel (0) target = $region33
    $region32: #{_ffn_impl.1} parent=1 // pred_region
      _
    $region33: #{_ffn_impl.1} parent=1 // pred_fallthru
      _
    // Predicated region
    $region34: #{_ffn_impl.1} parent=1 // pred_check
      _
    $region35: #{_ffn_impl.1} parent=1 // pred_check_branch
      %253 = sbr.rel (0) target = $region37
    $region36: #{_ffn_impl.1} parent=1 // pred_region
      _
    $region37: #{_ffn_impl.1} parent=1 // pred_fallthru
      _
    %254 = vsyncpa [#allocation3], 1
    %255 = vsyncpa [#allocation5], 1

</llo_original>
